<compile_context>
chip_gen: v7x
topology: tpu7x:2x2x1
jax: 0.10.0
libtpu: 0.0.40
codegen_flags: <defaults>
</compile_context>

<pallas_src>
import functools

import jax
import jax.numpy as jnp
from jax.experimental import pallas as pl
from jax.experimental.pallas import tpu as pltpu


def _round_up(x, mult):
    return (x + mult - 1) // mult * mult


def _lora_linear_kernel(x_ref, wt_ref, bias_ref, la_ref, lb_ref, o_ref,
                        acc_ref, ax_ref, *, scale):
    """One (i, j, k) grid step of out = x @ W^T + b + scale * (x @ A) @ B.

    i -> M tile, j -> N (out_features) tile, k -> K (in_features) tile.
    acc_ref accumulates the frozen-linear partial products over K; ax_ref
    accumulates x @ lora_a (computed only while j == 0, reused for j > 0).
    """
    j = pl.program_id(1)
    k = pl.program_id(2)
    nk = pl.num_programs(2)

    @pl.when(k == 0)
    def _():
        acc_ref[...] = jnp.zeros_like(acc_ref)

    x = x_ref[...]

    # Frozen linear partial product on the MXU, f32 accumulation.
    acc_ref[...] += jnp.dot(x, wt_ref[...], preferred_element_type=jnp.float32)

    # LoRA "down" projection x @ A depends only on (i, k): compute it once per
    # M row block (during the j == 0 sweep) and keep it resident in VMEM.
    @pl.when(j == 0)
    def _():
        @pl.when(k == 0)
        def _():
            ax_ref[...] = jnp.zeros_like(ax_ref)

        ax_ref[...] += jnp.dot(x, la_ref[...],
                               preferred_element_type=jnp.float32)

    # Epilogue: rank-r "up" projection, bias add, scale, write the output tile.
    @pl.when(k == nk - 1)
    def _():
        lora = jnp.dot(ax_ref[...].astype(lb_ref.dtype), lb_ref[...],
                       preferred_element_type=jnp.float32)
        out = acc_ref[...] + bias_ref[...].astype(jnp.float32) + scale * lora
        # TODO(synk): nn.Dropout(p=0.1) at dropout_position='post' is identity
        # in eval mode; training-mode stochastic dropout (pltpu.prng_*) is not
        # implemented here.
        o_ref[...] = out.astype(o_ref.dtype)


def linear_adapter_forward(x, weight, bias, lora_a, lora_b, *,
                           alpha=32, tm=256, tn=256, tk=512,
                           compute_dtype=None):
    """LoRA linear (eval mode): out = x @ W^T + b + (alpha/rank) * (x @ A) @ B.

    x:      [..., in_features]
    weight: [out_features, in_features]   (frozen nn.Linear weight)
    bias:   [out_features] or None
    lora_a: [in_features, rank]
    lora_b: [rank, out_features]
    """
    out_features, in_features = weight.shape
    rank = lora_a.shape[1]
    scale = alpha / rank
    out_dtype = x.dtype

    orig_lead = x.shape[:-1]
    x2d = x.reshape(-1, in_features)
    m = x2d.shape[0]

    if bias is None:
        bias = jnp.zeros((out_features,), dtype=weight.dtype)

    # Matmul operands may be downcast (e.g. bf16) for MXU throughput; the
    # accumulation and epilogue stay in f32 inside the kernel.
    if compute_dtype is not None:
        x2d = x2d.astype(compute_dtype)
        weight = weight.astype(compute_dtype)
        lora_a = lora_a.astype(compute_dtype)
        lora_b = lora_b.astype(compute_dtype)

    wt = weight.T                               # (in, out)
    bias2d = bias.reshape(1, out_features)

    # ---- Tile sizing / padding -------------------------------------------
    # M tiles 8-aligned (sublanes), N/K tiles 128-aligned (lanes / MXU).
    # Small problems clamp the tile to the aligned problem size so VMEM use
    # never exceeds the data; large problems get big MXU-friendly tiles.
    tm_eff = min(tm, _round_up(m, 8))
    tn_eff = min(tn, _round_up(out_features, 128))
    tk_eff = min(tk, _round_up(in_features, 128))

    m_pad = _round_up(m, tm_eff)
    n_pad = _round_up(out_features, tn_eff)
    k_pad = _round_up(in_features, tk_eff)

    # Zero padding keeps the math identical; padded rows/cols are sliced off.
    x2d = jnp.pad(x2d, ((0, m_pad - m), (0, k_pad - in_features)))
    wt = jnp.pad(wt, ((0, k_pad - in_features), (0, n_pad - out_features)))
    bias2d = jnp.pad(bias2d, ((0, 0), (0, n_pad - out_features)))
    lora_a_p = jnp.pad(lora_a, ((0, k_pad - in_features), (0, 0)))
    lora_b_p = jnp.pad(lora_b, ((0, 0), (0, n_pad - out_features)))

    grid = (m_pad // tm_eff, n_pad // tn_eff, k_pad // tk_eff)

    out = pl.pallas_call(
        functools.partial(_lora_linear_kernel, scale=scale),
        out_shape=jax.ShapeDtypeStruct((m_pad, n_pad), out_dtype),
        grid_spec=pltpu.PrefetchScalarGridSpec(
            num_scalar_prefetch=0,
            grid=grid,
            in_specs=[
                pl.BlockSpec((tm_eff, tk_eff), lambda i, j, k: (i, k)),   # x
                pl.BlockSpec((tk_eff, tn_eff), lambda i, j, k: (k, j)),   # W^T
                pl.BlockSpec((1, tn_eff), lambda i, j, k: (0, j)),        # bias
                pl.BlockSpec((tk_eff, rank), lambda i, j, k: (k, 0)),     # lora_a
                pl.BlockSpec((rank, tn_eff), lambda i, j, k: (0, j)),     # lora_b
            ],
            out_specs=pl.BlockSpec((tm_eff, tn_eff), lambda i, j, k: (i, j)),
            scratch_shapes=[
                pltpu.VMEM((tm_eff, tn_eff), jnp.float32),   # acc = x @ W^T
                pltpu.VMEM((tm_eff, rank), jnp.float32),     # ax  = x @ lora_a
            ],
        ),
        compiler_params=pltpu.CompilerParams(
            # Only the M axis is megacore-parallel: the N and K sweeps carry
            # the acc/ax scratch dependencies and must stay on one core.
            # Default scoped VMEM is ample for these tiles (~3 MiB f32);
            # raise vmem_limit_bytes here only if you grow the tiles further.
            dimension_semantics=("parallel", "arbitrary", "arbitrary")),
    )(x2d, wt, bias2d, lora_a_p, lora_b_p)

    out = out[:m, :out_features]
    return out.reshape(*orig_lead, out_features)


if __name__ == "__main__":
    key = jax.random.PRNGKey(0)
    k_x, k_w, k_b, k_a, k_lb = jax.random.split(key, 5)

    batch, seq = 2, 8
    in_features, out_features, rank, alpha = 32, 32, 8, 32

    x = jax.random.normal(k_x, (batch, seq, in_features), dtype=jnp.float32)
    # Frozen nn.Linear params (deterministic synthetic init).
    weight = jax.random.normal(k_w, (out_features, in_features),
                               dtype=jnp.float32) * 0.1
    bias = jax.random.normal(k_b, (out_features,), dtype=jnp.float32) * 0.1
    # lora_a: uniform init (module's 'xavier' branch -> torch uniform_ [0,1)).
    lora_a = jax.random.uniform(k_a, (in_features, rank), dtype=jnp.float32)
    # lora_b: module inits to zeros; small random values to exercise the path.
    lora_b = jax.random.normal(k_lb, (rank, out_features),
                               dtype=jnp.float32) * 0.05

    out = linear_adapter_forward(x, weight, bias, lora_a, lora_b, alpha=alpha)
    out = jax.block_until_ready(out)

    # Pure-JAX reference check (eval-mode forward of LinearAdapter).
    scale = alpha / rank
    ref = (x @ weight.T + bias) + scale * ((x @ lora_a) @ lora_b)
    assert out.shape == (batch, seq, out_features)
    assert jnp.allclose(out, ref, atol=1e-4, rtol=1e-4), "mismatch vs reference"

    print("KERNEL_OK")
</pallas_src>

<mosaic_0001>
module attributes {stable_mosaic.version = 11 : i64} {
  func.func @_lora_linear_kernel(%arg0: i32, %arg1: i32, %arg2: i32, %arg3: memref<16x128xf32, #tpu.memory_space<vmem>>, %arg4: memref<128x128xf32, #tpu.memory_space<vmem>>, %arg5: memref<1x128xf32, #tpu.memory_space<vmem>>, %arg6: memref<128x8xf32, #tpu.memory_space<vmem>>, %arg7: memref<8x128xf32, #tpu.memory_space<vmem>>, %arg8: memref<16x128xf32, #tpu.memory_space<vmem>>, %arg9: memref<16x128xf32, #tpu.memory_space<vmem>>, %arg10: memref<16x8xf32, #tpu.memory_space<vmem>>) attributes {dimension_semantics = [#tpu.dimension_semantics<parallel>, #tpu.dimension_semantics<arbitrary>, #tpu.dimension_semantics<arbitrary>], iteration_bounds = array<i64: 1, 1, 1>, scalar_prefetch = 0 : i64, scratch_operands = 2 : i64, tpu.core_type = #tpu.core_type<tc>, window_params = [{transform_indices = @transform_0, window_bounds = array<i64: 16, 128>}, {transform_indices = @transform_1, window_bounds = array<i64: 128, 128>}, {transform_indices = @transform_2, window_bounds = array<i64: 1, 128>}, {transform_indices = @transform_3, window_bounds = array<i64: 128, 8>}, {transform_indices = @transform_4, window_bounds = array<i64: 8, 128>}, {transform_indices = @transform_5, window_bounds = array<i64: 16, 128>}]} {
    %c0_i32 = arith.constant 0 : i32
    %0 = arith.cmpi eq, %arg2, %c0_i32 : i32
    %1 = arith.extui %0 : i1 to i32
    %c0_i32_0 = arith.constant 0 : i32
    %2 = arith.cmpi ne, %1, %c0_i32_0 : i32
    scf.if %2 {
      %cst_12 = arith.constant 0.000000e+00 : f32
      %15 = vector.broadcast %cst_12 : f32 to vector<16x128xf32>
      %c0_13 = arith.constant 0 : index
      %c0_14 = arith.constant 0 : index
      %16 = vector.load %arg9[%c0_13, %c0_14] : memref<16x128xf32, #tpu.memory_space<vmem>>, vector<16x128xf32>
      tpu.vector_store %arg9[%c0_13, %c0_14], %15 {strides = array<i32>} : memref<16x128xf32, #tpu.memory_space<vmem>>, vector<16x128xf32>,
    } else {
    }
    %c0 = arith.constant 0 : index
    %c0_1 = arith.constant 0 : index
    %3 = vector.load %arg3[%c0, %c0_1] : memref<16x128xf32, #tpu.memory_space<vmem>>, vector<16x128xf32>
    %c0_2 = arith.constant 0 : index
    %c0_3 = arith.constant 0 : index
    %4 = vector.load %arg9[%c0_2, %c0_3] : memref<16x128xf32, #tpu.memory_space<vmem>>, vector<16x128xf32>
    %c0_4 = arith.constant 0 : index
    %c0_5 = arith.constant 0 : index
    %5 = vector.load %arg4[%c0_4, %c0_5] : memref<128x128xf32, #tpu.memory_space<vmem>>, vector<128x128xf32>
    %cst = arith.constant dense<0.000000e+00> : vector<16x128xf32>
    %6 = tpu.matmul %3, %5, %cst {dimension_numbers = #tpu.dot_dimension_numbers<[1], [0], [0], [1], [0, 0, 1, 1], [], []>} : vector<16x128xf32>, vector<128x128xf32>, vector<16x128xf32> -> vector<16x128xf32>
    %7 = arith.addf %4, %6 : vector<16x128xf32>
    %c0_6 = arith.constant 0 : index
    %c0_7 = arith.constant 0 : index
    %8 = vector.load %arg9[%c0_6, %c0_7] : memref<16x128xf32, #tpu.memory_space<vmem>>, vector<16x128xf32>
    tpu.vector_store %arg9[%c0_6, %c0_7], %7 {strides = array<i32>} : memref<16x128xf32, #tpu.memory_space<vmem>>, vector<16x128xf32>,
    %c0_i32_8 = arith.constant 0 : i32
    %9 = arith.cmpi eq, %arg1, %c0_i32_8 : i32
    %10 = arith.extui %9 : i1 to i32
    %c0_i32_9 = arith.constant 0 : i32
    %11 = arith.cmpi ne, %10, %c0_i32_9 : i32
    scf.if %11 {
      %c0_i32_12 = arith.constant 0 : i32
      %15 = arith.cmpi eq, %arg2, %c0_i32_12 : i32
      %16 = arith.extui %15 : i1 to i32
      %c0_i32_13 = arith.constant 0 : i32
      %17 = arith.cmpi ne, %16, %c0_i32_13 : i32
      scf.if %17 {
        %cst_21 = arith.constant 0.000000e+00 : f32
        %23 = vector.broadcast %cst_21 : f32 to vector<16x8xf32>
        %c0_22 = arith.constant 0 : index
        %c0_23 = arith.constant 0 : index
        %24 = vector.load %arg10[%c0_22, %c0_23] : memref<16x8xf32, #tpu.memory_space<vmem>>, vector<16x8xf32>
        tpu.vector_store %arg10[%c0_22, %c0_23], %23 {strides = array<i32>} : memref<16x8xf32, #tpu.memory_space<vmem>>, vector<16x8xf32>,
      } else {
      }
      %c0_14 = arith.constant 0 : index
      %c0_15 = arith.constant 0 : index
      %18 = vector.load %arg10[%c0_14, %c0_15] : memref<16x8xf32, #tpu.memory_space<vmem>>, vector<16x8xf32>
      %c0_16 = arith.constant 0 : index
      %c0_17 = arith.constant 0 : index
      %19 = vector.load %arg6[%c0_16, %c0_17] : memref<128x8xf32, #tpu.memory_space<vmem>>, vector<128x8xf32>
      %cst_18 = arith.constant dense<0.000000e+00> : vector<16x8xf32>
      %20 = tpu.matmul %3, %19, %cst_18 {dimension_numbers = #tpu.dot_dimension_numbers<[1], [0], [0], [1], [0, 0, 1, 1], [], []>} : vector<16x128xf32>, vector<128x8xf32>, vector<16x8xf32> -> vector<16x8xf32>
      %21 = arith.addf %18, %20 : vector<16x8xf32>
      %c0_19 = arith.constant 0 : index
      %c0_20 = arith.constant 0 : index
      %22 = vector.load %arg10[%c0_19, %c0_20] : memref<16x8xf32, #tpu.memory_space<vmem>>, vector<16x8xf32>
      tpu.vector_store %arg10[%c0_19, %c0_20], %21 {strides = array<i32>} : memref<16x8xf32, #tpu.memory_space<vmem>>, vector<16x8xf32>,
    } else {
    }
    %c0_i32_10 = arith.constant 0 : i32
    %12 = arith.cmpi eq, %arg2, %c0_i32_10 : i32
    %13 = arith.extui %12 : i1 to i32
    %c0_i32_11 = arith.constant 0 : i32
    %14 = arith.cmpi ne, %13, %c0_i32_11 : i32
    scf.if %14 {
      %c0_12 = arith.constant 0 : index
      %c0_13 = arith.constant 0 : index
      %15 = vector.load %arg10[%c0_12, %c0_13] : memref<16x8xf32, #tpu.memory_space<vmem>>, vector<16x8xf32>
      %c0_14 = arith.constant 0 : index
      %c0_15 = arith.constant 0 : index
      %16 = vector.load %arg7[%c0_14, %c0_15] : memref<8x128xf32, #tpu.memory_space<vmem>>, vector<8x128xf32>
      %cst_16 = arith.constant dense<0.000000e+00> : vector<16x128xf32>
      %17 = tpu.matmul %15, %16, %cst_16 {dimension_numbers = #tpu.dot_dimension_numbers<[1], [0], [0], [1], [0, 0, 1, 1], [], []>} : vector<16x8xf32>, vector<8x128xf32>, vector<16x128xf32> -> vector<16x128xf32>
      %c0_17 = arith.constant 0 : index
      %c0_18 = arith.constant 0 : index
      %18 = vector.load %arg9[%c0_17, %c0_18] : memref<16x128xf32, #tpu.memory_space<vmem>>, vector<16x128xf32>
      %c0_19 = arith.constant 0 : index
      %c0_20 = arith.constant 0 : index
      %19 = vector.load %arg5[%c0_19, %c0_20] : memref<1x128xf32, #tpu.memory_space<vmem>>, vector<1x128xf32>
      %20 = vector.broadcast %19 : vector<1x128xf32> to vector<16x128xf32>
      %21 = arith.addf %18, %20 : vector<16x128xf32>
      %cst_21 = arith.constant 4.000000e+00 : f32
      %22 = vector.broadcast %cst_21 : f32 to vector<16x128xf32>
      %23 = arith.mulf %22, %17 : vector<16x128xf32>
      %24 = arith.addf %21, %23 : vector<16x128xf32>
      %c0_22 = arith.constant 0 : index
      %c0_23 = arith.constant 0 : index
      %25 = vector.load %arg8[%c0_22, %c0_23] : memref<16x128xf32, #tpu.memory_space<vmem>>, vector<16x128xf32>
      tpu.vector_store %arg8[%c0_22, %c0_23], %24 {strides = array<i32>} : memref<16x128xf32, #tpu.memory_space<vmem>>, vector<16x128xf32>,
    } else {
    }
    return
  }
  func.func @transform_0(%arg0: i32, %arg1: i32, %arg2: i32) -> (i32, i32) {
    %c0_i32 = arith.constant 0 : i32
    return %arg0, %arg2 : i32, i32
  }
  func.func @transform_1(%arg0: i32, %arg1: i32, %arg2: i32) -> (i32, i32) {
    %c0_i32 = arith.constant 0 : i32
    return %arg2, %arg1 : i32, i32
  }
  func.func @transform_2(%arg0: i32, %arg1: i32, %arg2: i32) -> (i32, i32) {
    %c0_i32 = arith.constant 0 : i32
    %c0_i32_0 = arith.constant 0 : i32
    return %c0_i32, %arg1 : i32, i32
  }
  func.func @transform_3(%arg0: i32, %arg1: i32, %arg2: i32) -> (i32, i32) {
    %c0_i32 = arith.constant 0 : i32
    %c0_i32_0 = arith.constant 0 : i32
    return %arg2, %c0_i32 : i32, i32
  }
  func.func @transform_4(%arg0: i32, %arg1: i32, %arg2: i32) -> (i32, i32) {
    %c0_i32 = arith.constant 0 : i32
    %c0_i32_0 = arith.constant 0 : i32
    return %c0_i32, %arg1 : i32, i32
  }
  func.func @transform_5(%arg0: i32, %arg1: i32, %arg2: i32) -> (i32, i32) {
    %c0_i32 = arith.constant 0 : i32
    return %arg0, %arg1 : i32, i32
  }
}

</mosaic_0001>

<llo_original>
// kernel: tpu_custom_call.1
$region0: #{tpu_custom_call.1}
  #allocation0 [shape = 'u32[]', space=smem, size = 0x4, offset = 0x4, fixed_abs, tag = 'smem constant byte address 0x4 - core index']
  #allocation1 [shape = 'u32[144,128]{1,0:T(1,128)}', space=vmem, size = 0x12000, scoped, tag = 'internal scratch']
  #allocation2 [shape = 'f32[16,128]{1,0:T(8,128)}', space=vmem, size = 0x2000, scoped, tag = 'scratch operand']
  #allocation3 [shape = 'f32[16,8]{1,0:T(8,128)}', space=vmem, size = 0x2000, scoped, tag = 'scratch operand']
  %s0 = inlined_call_operand.hbm [shape: f32[16,128], index: 0, kind: input, shape index: {}]
  %s1 = inlined_call_operand.vmem [shape: f32[128,128], index: 1, kind: input, shape index: {}]
  %s2 = inlined_call_operand.vmem [shape: f32[1,128], index: 2, kind: input, shape index: {}]
  %s3 = inlined_call_operand.vmem [shape: f32[128,8], index: 3, kind: input, shape index: {}]
  %s4 = inlined_call_operand.vmem [shape: f32[8,128], index: 4, kind: input, shape index: {}]
  %s5 = inlined_call_operand.hbm [shape: f32[16,128], index: 5, kind: output, shape index: {}]
  %s6 = sld [smem:[#allocation0]]
  $region50: #{tpu_custom_call.1} parent=0
    _
  %s8 = ssub.s32 1, %s6
  %s9 = scalar_select 0, %s8, %s6
  $region1: #{tpu_custom_call.1} parent=0
    #allocation4 [shape = 'u8[8192]{0}', space=vmem, size = 0x2000, scoped, tag = 'input window, operand 0, single buffered']
    #allocation5 [shape = 's32[1]{0}', space=sflag, size = 0x4, scoped, tag = 'scoped memory for tpu_custom_call.1']
    #allocation6 [shape = 's32[1]{0}', space=sflag, size = 0x4, scoped, tag = 'scoped memory for tpu_custom_call.1']
    #allocation7 [shape = 'u8[8192]{0}', space=vmem, size = 0x2000, scoped, tag = 'output window, operand 0, single buffered']
    %10 = vsyncpa [#allocation5], 0
    %11 = vsyncpa [#allocation6], 0
    // Predicated region
    $region2: #{tpu_custom_call.1} parent=1 // pred_check
      _
    $region3: #{tpu_custom_call.1} parent=1 // pred_check_branch
      %13 = sbr.rel (0) target = $region5
    $region4: #{tpu_custom_call.1} parent=1 // pred_region
      %s15 = ssub.s32 256, 256
      %16 = vsyncadd [#allocation5], %s15
      %s17 = sshll.u32 [#allocation4], 4
      %s18 = int_to_ptr.vmem [resolvable:$true] %s17
      %23 = dma.hbm_to_vmem [thread:$0]  %s0, 256, %s18, [#allocation5], 128, 128, 8
    $region5: #{tpu_custom_call.1} parent=1 // pred_fallthru
      _
    // Predicated region
    $region6: #{tpu_custom_call.1} parent=1 // pred_check
      _
    $region7: #{tpu_custom_call.1} parent=1 // pred_check_branch
      %25 = sbr.rel (0) target = $region9
    $region8: #{tpu_custom_call.1} parent=1 // pred_region
      _
    $region9: #{tpu_custom_call.1} parent=1 // pred_fallthru
      _
    // Predicated region
    $region10: #{tpu_custom_call.1} parent=1 // pred_check
      _
    $region11: #{tpu_custom_call.1} parent=1 // pred_check_branch
      %27 = sbr.rel (0) target = $region13
    $region12: #{tpu_custom_call.1} parent=1 // pred_region
      _
    $region13: #{tpu_custom_call.1} parent=1 // pred_fallthru
      _
    // Predicated region
    $region14: #{tpu_custom_call.1} parent=1 // pred_check
      _
    $region15: #{tpu_custom_call.1} parent=1 // pred_check_branch
      %29 = sbr.rel (0) target = $region17
    $region16: #{tpu_custom_call.1} parent=1 // pred_region
      _
    $region17: #{tpu_custom_call.1} parent=1 // pred_fallthru
      _
    // Predicated region
    $region18: #{tpu_custom_call.1} parent=1 // pred_check
      _
    $region19: #{tpu_custom_call.1} parent=1 // pred_check_branch
      %31 = sbr.rel (0) target = $region21
    $region20: #{tpu_custom_call.1} parent=1 // pred_region
      _
    $region21: #{tpu_custom_call.1} parent=1 // pred_fallthru
      _
    // Predicated region
    $region22: #{tpu_custom_call.1} parent=1 // pred_check
      _
    $region23: #{tpu_custom_call.1} parent=1 // pred_check_branch
      %33 = sbr.rel (0) target = $region25
    $region24: #{tpu_custom_call.1} parent=1 // pred_region
      %34 = dma.done [#allocation5], 256
    $region25: #{tpu_custom_call.1} parent=1 // pred_fallthru
      _
    %p35 = scmp.eq.s32.totalorder 0, 0
    // Predicated region
    $region26: #{tpu_custom_call.1} parent=1 // pred_check
      %p36 = pneg %p35
    $region27: #{tpu_custom_call.1} parent=1 // pred_check_branch
      %38 = sbr.rel (%p36) target = $region29
    $region28: #{tpu_custom_call.1} parent=1 // pred_region
      %39 = vst [vmem:[#allocation2] sm:$0xff] 0.0
      %40 = vst [vmem:[#allocation2 + $0x8] sm:$0xff] 0.0
    $region29: #{tpu_custom_call.1} parent=1 // pred_fallthru
      _
    %v41 = vld [vmem:[#allocation4] sm:$0xff]
    %v42 = vld [vmem:[#allocation4 + $0x8] sm:$0xff]
    %v43 = vld [vmem:[#allocation2] sm:$0xff]
    %v44 = vld [vmem:[#allocation2 + $0x8] sm:$0xff]
    %v45 = vld [vmem:[%s1] sm:$0xff]
    %v46 = vld [vmem:[%s1 + $0x8] sm:$0xff]
    %v47 = vld [vmem:[%s1 + $0x10] sm:$0xff]
    %v48 = vld [vmem:[%s1 + $0x18] sm:$0xff]
    %v49 = vld [vmem:[%s1 + $0x20] sm:$0xff]
    %v50 = vld [vmem:[%s1 + $0x28] sm:$0xff]
    %v51 = vld [vmem:[%s1 + $0x30] sm:$0xff]
    %v52 = vld [vmem:[%s1 + $0x38] sm:$0xff]
    %v53 = vld [vmem:[%s1 + $0x40] sm:$0xff]
    %v54 = vld [vmem:[%s1 + $0x48] sm:$0xff]
    %v55 = vld [vmem:[%s1 + $0x50] sm:$0xff]
    %v56 = vld [vmem:[%s1 + $0x58] sm:$0xff]
    %v57 = vld [vmem:[%s1 + $0x60] sm:$0xff]
    %v58 = vld [vmem:[%s1 + $0x68] sm:$0xff]
    %v59 = vld [vmem:[%s1 + $0x70] sm:$0xff]
    %v60 = vld [vmem:[%s1 + $0x78] sm:$0xff]
    %61 = vmatprep.subr.mxu0 0.0
    %62 = vmatpush1.msra.mxu0 %v45
    %63 = vmatprep.subr.mxu0 0.0
    %64 = vmatpush1.msra.mxu0 %v46
    %65 = vmatprep.subr.mxu0 0.0
    %66 = vmatpush1.msra.mxu0 %v47
    %67 = vmatprep.subr.mxu0 0.0
    %68 = vmatpush1.msra.mxu0 %v48
    %69 = vmatprep.subr.mxu0 0.0
    %70 = vmatpush1.msra.mxu0 %v49
    %71 = vmatprep.subr.mxu0 0.0
    %72 = vmatpush1.msra.mxu0 %v50
    %73 = vmatprep.subr.mxu0 0.0
    %74 = vmatpush1.msra.mxu0 %v51
    %75 = vmatprep.subr.mxu0 0.0
    %76 = vmatpush1.msra.mxu0 %v52
    %77 = vmatprep.subr.mxu0 0.0
    %78 = vmatpush1.msra.mxu0 %v53
    %79 = vmatprep.subr.mxu0 0.0
    %80 = vmatpush1.msra.mxu0 %v54
    %81 = vmatprep.subr.mxu0 0.0
    %82 = vmatpush1.msra.mxu0 %v55
    %83 = vmatprep.subr.mxu0 0.0
    %84 = vmatpush1.msra.mxu0 %v56
    %85 = vmatprep.subr.mxu0 0.0
    %86 = vmatpush1.msra.mxu0 %v57
    %87 = vmatprep.subr.mxu0 0.0
    %88 = vmatpush1.msra.mxu0 %v58
    %89 = vmatprep.subr.mxu0 0.0
    %90 = vmatpush1.msra.mxu0 %v59
    %91 = vmatprep.subr.mxu0 0.0
    %92 = vmatpush1.msra.mxu0 %v60
    %93 = vmatprep.subr.mxu0 0.0
    %94 = vmatpush1.msra.mxu0 0.0
    %95 = vmatprep.subr.mxu0 0.0
    %96 = vmatpush1.msra.mxu0 0.0
    %97 = vmatprep.subr.mxu0 0.0
    %98 = vmatpush1.msra.mxu0 0.0
    %99 = vmatprep.subr.mxu0 0.0
    %100 = vmatpush1.msra.mxu0 0.0
    %101 = vmatprep.subr.mxu0 0.0
    %102 = vmatpush1.msra.mxu0 0.0
    %103 = vmatprep.subr.mxu0 0.0
    %104 = vmatpush1.msra.mxu0 0.0
    %105 = vmatprep.subr.mxu0 0.0
    %106 = vmatpush1.msra.mxu0 0.0
    %107 = vmatprep.subr.mxu0 0.0
    %108 = vmatpush1.msra.mxu0 0.0
    %109 = vmatprep.subr.mxu0 0.0
    %110 = vmatpush1.msra.mxu0 0.0
    %111 = vmatprep.subr.mxu0 0.0
    %112 = vmatpush1.msra.mxu0 0.0
    %113 = vmatprep.subr.mxu0 0.0
    %114 = vmatpush1.msra.mxu0 0.0
    %115 = vmatprep.subr.mxu0 0.0
    %116 = vmatpush1.msra.mxu0 0.0
    %117 = vmatprep.subr.mxu0 0.0
    %118 = vmatpush1.msra.mxu0 0.0
    %119 = vmatprep.subr.mxu0 0.0
    %120 = vmatpush1.msra.mxu0 0.0
    %121 = vmatprep.subr.mxu0 0.0
    %122 = vmatpush1.msra.mxu0 0.0
    %123 = vmatprep.subr.mxu0 0.0
    %124 = vmatpush1.msra.mxu0 0.0
    %125 = vmatprep.mubr.f32.mxu0 0.0
    %126 = vmatmul.mubr.f32.gmra.mrb[0].mxu0 %v41
    %v127 = vpop.f32.mrb[0].mxu0
    %v128 = vadd.f32 0.0, %v127
    %v129 = vpop.f32.mrb[0].mxu0
    %130 = vmatprep.mubr.f32.mxu0 0.0
    %131 = vmatmul.mubr.f32.gmra.mrb[0].mxu0 %v42
    %v132 = vpop.f32.mrb[0].mxu0
    %v133 = vadd.f32 0.0, %v132
    %v134 = vpop.f32.mrb[0].mxu0
    %135 = vdwg.mxu0
    %v136 = vadd.f32 %v43, %v128
    %v137 = vadd.f32 %v44, %v133
    %138 = vst [vmem:[#allocation2] sm:$0xff] %v136
    %139 = vst [vmem:[#allocation2 + $0x8] sm:$0xff] %v137
    %p140 = scmp.eq.s32.totalorder 0, 0
    // Predicated region
    $region30: #{tpu_custom_call.1} parent=1 // pred_check
      %p141 = pneg %p140
    $region31: #{tpu_custom_call.1} parent=1 // pred_check_branch
      %143 = sbr.rel (%p141) target = $region33
    $region32: #{tpu_custom_call.1} parent=1 // pred_region
      // Predicated region
      $region34: #{tpu_custom_call.1} parent=32 // pred_check
        %p144 = pneg %p35
      $region35: #{tpu_custom_call.1} parent=32 // pred_check_branch
        %146 = sbr.rel (%p144) target = $region37
      $region36: #{tpu_custom_call.1} parent=32 // pred_region
        %vm147 = vcmask 64512
        %148 = vst.msk [vmem:[#allocation3] sm:$0xff] %vm147, 0.0
        %149 = vst.msk [vmem:[#allocation3 + $0x8] sm:$0xff] %vm147, 0.0
      $region37: #{tpu_custom_call.1} parent=32 // pred_fallthru
        _
      %v150 = vld [vmem:[#allocation3] sm:$0xff]
      %v151 = vld [vmem:[#allocation3 + $0x8] sm:$0xff]
      %v152 = vld [vmem:[%s3] sm:$0xff]
      %v153 = vld [vmem:[%s3 + $0x8] sm:$0xff]
      %v154 = vld [vmem:[%s3 + $0x10] sm:$0xff]
      %v155 = vld [vmem:[%s3 + $0x18] sm:$0xff]
      %v156 = vld [vmem:[%s3 + $0x20] sm:$0xff]
      %v157 = vld [vmem:[%s3 + $0x28] sm:$0xff]
      %v158 = vld [vmem:[%s3 + $0x30] sm:$0xff]
      %v159 = vld [vmem:[%s3 + $0x38] sm:$0xff]
      %v160 = vld [vmem:[%s3 + $0x40] sm:$0xff]
      %v161 = vld [vmem:[%s3 + $0x48] sm:$0xff]
      %v162 = vld [vmem:[%s3 + $0x50] sm:$0xff]
      %v163 = vld [vmem:[%s3 + $0x58] sm:$0xff]
      %v164 = vld [vmem:[%s3 + $0x60] sm:$0xff]
      %v165 = vld [vmem:[%s3 + $0x68] sm:$0xff]
      %v166 = vld [vmem:[%s3 + $0x70] sm:$0xff]
      %v167 = vld [vmem:[%s3 + $0x78] sm:$0xff]
      %168 = vmatprep.subr.mxu0 0.0
      %169 = vmatpush1.msra.mxu0 %v152
      %170 = vmatprep.subr.mxu0 0.0
      %171 = vmatpush1.msra.mxu0 %v153
      %172 = vmatprep.subr.mxu0 0.0
      %173 = vmatpush1.msra.mxu0 %v154
      %174 = vmatprep.subr.mxu0 0.0
      %175 = vmatpush1.msra.mxu0 %v155
      %176 = vmatprep.subr.mxu0 0.0
      %177 = vmatpush1.msra.mxu0 %v156
      %178 = vmatprep.subr.mxu0 0.0
      %179 = vmatpush1.msra.mxu0 %v157
      %180 = vmatprep.subr.mxu0 0.0
      %181 = vmatpush1.msra.mxu0 %v158
      %182 = vmatprep.subr.mxu0 0.0
      %183 = vmatpush1.msra.mxu0 %v159
      %184 = vmatprep.subr.mxu0 0.0
      %185 = vmatpush1.msra.mxu0 %v160
      %186 = vmatprep.subr.mxu0 0.0
      %187 = vmatpush1.msra.mxu0 %v161
      %188 = vmatprep.subr.mxu0 0.0
      %189 = vmatpush1.msra.mxu0 %v162
      %190 = vmatprep.subr.mxu0 0.0
      %191 = vmatpush1.msra.mxu0 %v163
      %192 = vmatprep.subr.mxu0 0.0
      %193 = vmatpush1.msra.mxu0 %v164
      %194 = vmatprep.subr.mxu0 0.0
      %195 = vmatpush1.msra.mxu0 %v165
      %196 = vmatprep.subr.mxu0 0.0
      %197 = vmatpush1.msra.mxu0 %v166
      %198 = vmatprep.subr.mxu0 0.0
      %199 = vmatpush1.msra.mxu0 %v167
      %200 = vmatprep.subr.mxu0 0.0
      %201 = vmatpush1.msra.mxu0 0.0
      %202 = vmatprep.subr.mxu0 0.0
      %203 = vmatpush1.msra.mxu0 0.0
      %204 = vmatprep.subr.mxu0 0.0
      %205 = vmatpush1.msra.mxu0 0.0
      %206 = vmatprep.subr.mxu0 0.0
      %207 = vmatpush1.msra.mxu0 0.0
      %208 = vmatprep.subr.mxu0 0.0
      %209 = vmatpush1.msra.mxu0 0.0
      %210 = vmatprep.subr.mxu0 0.0
      %211 = vmatpush1.msra.mxu0 0.0
      %212 = vmatprep.subr.mxu0 0.0
      %213 = vmatpush1.msra.mxu0 0.0
      %214 = vmatprep.subr.mxu0 0.0
      %215 = vmatpush1.msra.mxu0 0.0
      %216 = vmatprep.subr.mxu0 0.0
      %217 = vmatpush1.msra.mxu0 0.0
      %218 = vmatprep.subr.mxu0 0.0
      %219 = vmatpush1.msra.mxu0 0.0
      %220 = vmatprep.subr.mxu0 0.0
      %221 = vmatpush1.msra.mxu0 0.0
      %222 = vmatprep.subr.mxu0 0.0
      %223 = vmatpush1.msra.mxu0 0.0
      %224 = vmatprep.subr.mxu0 0.0
      %225 = vmatpush1.msra.mxu0 0.0
      %226 = vmatprep.subr.mxu0 0.0
      %227 = vmatpush1.msra.mxu0 0.0
      %228 = vmatprep.subr.mxu0 0.0
      %229 = vmatpush1.msra.mxu0 0.0
      %230 = vmatprep.subr.mxu0 0.0
      %231 = vmatpush1.msra.mxu0 0.0
      %232 = vmatprep.mubr.f32.mxu0 0.0
      %233 = vmatmul.mubr.f32.gmra.mrb[0].mxu0 %v41
      %v234 = vpop.f32.mrb[0].mxu0
      %v235 = vadd.f32 0.0, %v234
      %v236 = vpop.f32.mrb[0].mxu0
      %237 = vmatprep.mubr.f32.mxu0 0.0
      %238 = vmatmul.mubr.f32.gmra.mrb[0].mxu0 %v42
      %v239 = vpop.f32.mrb[0].mxu0
      %v240 = vadd.f32 0.0, %v239
      %v241 = vpop.f32.mrb[0].mxu0
      %242 = vdwg.mxu0
      %v243 = vadd.f32 %v150, %v235
      %v244 = vadd.f32 %v151, %v240
      %vm245 = vcmask 64512
      %246 = vst.msk [vmem:[#allocation3] sm:$0xff] %vm245, %v243
      %247 = vst.msk [vmem:[#allocation3 + $0x8] sm:$0xff] %vm245, %v244
    $region33: #{tpu_custom_call.1} parent=1 // pred_fallthru
      _
    // Predicated region
    $region38: #{tpu_custom_call.1} parent=1 // pred_check
      %p248 = pneg %p35
    $region39: #{tpu_custom_call.1} parent=1 // pred_check_branch
      %250 = sbr.rel (%p248) target = $region41
    $region40: #{tpu_custom_call.1} parent=1 // pred_region
      %v251 = vld [vmem:[#allocation3] sm:$0xff]
      %v252 = vld [vmem:[#allocation3 + $0x8] sm:$0xff]
      %v253 = vld [vmem:[%s4] sm:$0xff]
      %vm254 = vcmask 64512
      %v256 = vsel %vm254, %v251, 0
      %v259 = vsel %vm254, %v252, 0
      %261 = vmatprep.subr.mxu0 0.0
      %262 = vmatpush1.msra.mxu0 %v253
      %263 = vmatprep.subr.mxu0 0.0
      %264 = vmatpush1.msra.mxu0 0.0
      %265 = vmatprep.subr.mxu0 0.0
      %266 = vmatpush1.msra.mxu0 0.0
      %267 = vmatprep.subr.mxu0 0.0
      %268 = vmatpush1.msra.mxu0 0.0
      %269 = vmatprep.subr.mxu0 0.0
      %270 = vmatpush1.msra.mxu0 0.0
      %271 = vmatprep.subr.mxu0 0.0
      %272 = vmatpush1.msra.mxu0 0.0
      %273 = vmatprep.subr.mxu0 0.0
      %274 = vmatpush1.msra.mxu0 0.0
      %275 = vmatprep.subr.mxu0 0.0
      %276 = vmatpush1.msra.mxu0 0.0
      %277 = vmatprep.subr.mxu0 0.0
      %278 = vmatpush1.msra.mxu0 0.0
      %279 = vmatprep.subr.mxu0 0.0
      %280 = vmatpush1.msra.mxu0 0.0
      %281 = vmatprep.subr.mxu0 0.0
      %282 = vmatpush1.msra.mxu0 0.0
      %283 = vmatprep.subr.mxu0 0.0
      %284 = vmatpush1.msra.mxu0 0.0
      %285 = vmatprep.subr.mxu0 0.0
      %286 = vmatpush1.msra.mxu0 0.0
      %287 = vmatprep.subr.mxu0 0.0
      %288 = vmatpush1.msra.mxu0 0.0
      %289 = vmatprep.subr.mxu0 0.0
      %290 = vmatpush1.msra.mxu0 0.0
      %291 = vmatprep.subr.mxu0 0.0
      %292 = vmatpush1.msra.mxu0 0.0
      %293 = vmatprep.subr.mxu0 0.0
      %294 = vmatpush1.msra.mxu0 0.0
      %295 = vmatprep.subr.mxu0 0.0
      %296 = vmatpush1.msra.mxu0 0.0
      %297 = vmatprep.subr.mxu0 0.0
      %298 = vmatpush1.msra.mxu0 0.0
      %299 = vmatprep.subr.mxu0 0.0
      %300 = vmatpush1.msra.mxu0 0.0
      %301 = vmatprep.subr.mxu0 0.0
      %302 = vmatpush1.msra.mxu0 0.0
      %303 = vmatprep.subr.mxu0 0.0
      %304 = vmatpush1.msra.mxu0 0.0
      %305 = vmatprep.subr.mxu0 0.0
      %306 = vmatpush1.msra.mxu0 0.0
      %307 = vmatprep.subr.mxu0 0.0
      %308 = vmatpush1.msra.mxu0 0.0
      %309 = vmatprep.subr.mxu0 0.0
      %310 = vmatpush1.msra.mxu0 0.0
      %311 = vmatprep.subr.mxu0 0.0
      %312 = vmatpush1.msra.mxu0 0.0
      %313 = vmatprep.subr.mxu0 0.0
      %314 = vmatpush1.msra.mxu0 0.0
      %315 = vmatprep.subr.mxu0 0.0
      %316 = vmatpush1.msra.mxu0 0.0
      %317 = vmatprep.subr.mxu0 0.0
      %318 = vmatpush1.msra.mxu0 0.0
      %319 = vmatprep.subr.mxu0 0.0
      %320 = vmatpush1.msra.mxu0 0.0
      %321 = vmatprep.subr.mxu0 0.0
      %322 = vmatpush1.msra.mxu0 0.0
      %323 = vmatprep.subr.mxu0 0.0
      %324 = vmatpush1.msra.mxu0 0.0
      %325 = vmatprep.mubr.f32.mxu0 0.0
      %326 = vmatmul.mubr.f32.gmra.mrb[0].mxu0 %v256
      %v327 = vpop.f32.mrb[0].mxu0
      %v328 = vadd.f32 0.0, %v327
      %v329 = vpop.f32.mrb[0].mxu0
      %330 = vmatprep.mubr.f32.mxu0 0.0
      %331 = vmatmul.mubr.f32.gmra.mrb[0].mxu0 %v259
      %v332 = vpop.f32.mrb[0].mxu0
      %v333 = vadd.f32 0.0, %v332
      %v334 = vpop.f32.mrb[0].mxu0
      %335 = vdwg.mxu0
      %v336 = vld [vmem:[#allocation2] sm:$0xff]
      %v337 = vld [vmem:[#allocation2 + $0x8] sm:$0xff]
      %v338 = vld [vmem:[%s2] sm:$0x1]
      %v340 = vlaneseq
      %v341 = vshrl.u32 %v340, 7
      %v342 = vsub.s32 0, %v341
      %v343 = vrot.slane %v338, %v342
      %v345 = vadd.f32 %v336, %v343
      %v346 = vadd.f32 %v337, %v343
      %v347 = vmul.f32 %v328, 4.0
      %v348 = vmul.f32 %v333, 4.0
      %v349 = vadd.f32 %v345, %v347
      %v350 = vadd.f32 %v346, %v348
      %351 = vst [vmem:[#allocation7] sm:$0xff] %v349
      %352 = vst [vmem:[#allocation7 + $0x8] sm:$0xff] %v350
    $region41: #{tpu_custom_call.1} parent=1 // pred_fallthru
      _
    // Predicated region
    $region42: #{tpu_custom_call.1} parent=1 // pred_check
      _
    $region43: #{tpu_custom_call.1} parent=1 // pred_check_branch
      %354 = sbr.rel (0) target = $region45
    $region44: #{tpu_custom_call.1} parent=1 // pred_region
      %s356 = ssub.s32 256, 256
      %357 = vsyncadd [#allocation6], %s356
      %s358 = sshll.u32 [#allocation7], 4
      %s359 = int_to_ptr.vmem [resolvable:$true] %s358
      %364 = dma.vmem_to_hbm [thread:$0]  %s359, 256, %s5, [#allocation6], 128, 128, 8
    $region45: #{tpu_custom_call.1} parent=1 // pred_fallthru
      _
    // Predicated region
    $region46: #{tpu_custom_call.1} parent=1 // pred_check
      _
    $region47: #{tpu_custom_call.1} parent=1 // pred_check_branch
      %366 = sbr.rel (0) target = $region49
    $region48: #{tpu_custom_call.1} parent=1 // pred_region
      %367 = dma.done [#allocation6], 256
    $region49: #{tpu_custom_call.1} parent=1 // pred_fallthru
      _
    %368 = vsyncpa [#allocation5], 1
    %369 = vsyncpa [#allocation6], 1

</llo_original>
